<compile_context>
chip_gen: v5e
topology: v5e:2x2
jax: 0.10.0
libtpu: 0.0.40
codegen_flags: <defaults>
</compile_context>

<pallas_src>
import jax
import jax.numpy as jnp
from jax import lax
from jax.experimental import pallas as pl
from jax.experimental.pallas import tpu as pltpu


def _round_up(x, m):
    return ((x + m - 1) // m) * m


def _pick_tile(B, tile_b):
    # 128-row granularity keeps the transposed activations and the (1, TILE_B)
    # output lane-dense; cap at ~half the batch so the "parallel" grid axis has
    # >=2 steps for v7x's dual TensorCores (harmless on v5e/v6e).
    cap = _round_up(max((B + 1) // 2, 1), 128)
    return max(128, min(_round_up(tile_b, 128), cap))


def _mlp_kernel(y_ref,              # (TILE_B, d)  f32 input tile
                w1_ref, b1_ref,     # (n, d) f32, (n, 1) f32 (K folded in)
                ws_ref, bs_ref,     # (L, n, n) bf16, (L, n, 1) f32
                wl_ref, bl_ref,     # (n, 1) f32, (1, 1) f32
                o_ref):             # (1, 1, TILE_B) f32 output tile
    y = y_ref[...]                                            # (TILE_B, d) f32

    # fc1 (+ folded K) computed as W1 @ y^T via contraction on the last dim of
    # both operands (the q@k^T pattern) -> (n, TILE_B).  f32 MXU matmul; the
    # lane-sparse input tile is touched exactly once.
    h = lax.dot_general(w1_ref[...], y, (((1,), (1,)), ((), ())),
                        preferred_element_type=jnp.float32)   # (n, TILE_B)
    h = jnp.maximum(h + b1_ref[...], 0.0)

    # Hidden (n -> n) layers: W @ h, bf16 operands on the MXU, f32 accumulate,
    # all elementwise work on fully lane-dense (n, TILE_B) vregs.  L is a small
    # compile-time constant -> static unroll is fine.
    L = ws_ref.shape[0]
    for k in range(L):
        h = jnp.dot(ws_ref[k], h.astype(jnp.bfloat16),
                    preferred_element_type=jnp.float32)       # (n, TILE_B)
        h = jnp.maximum(h + bs_ref[k], 0.0)

    # Final n -> 1 layer: VPU multiply + cross-sublane reduce (MXU with N=1 is
    # wasteful).  Result is a single lane-dense (1, TILE_B) row.
    out = jnp.sum(h * wl_ref[...], axis=0, keepdims=True) + bl_ref[...]
    o_ref[...] = jax.nn.sigmoid(out)[None]                    # (1, 1, TILE_B)


def prepare_kernel_params(params, K):
    """Fold scalar K into the first bias; reshape biases/fcl weight to columns;
    cast hidden-layer weights to bf16 for the MXU (fc1 stays f32)."""
    w1, b1, ws, bs, wl, bl = params            # torch layout (out, in)
    n, _ = w1.shape
    L = ws.shape[0]
    # (y - K) @ W1^T + b1 == y @ W1^T + (b1 - K * W1.sum(axis=1)).  Exact for
    # scalar K only; a per-feature K would need b1 - W1 @ K instead.
    b1_col = (b1 - K * jnp.sum(w1, axis=1)).reshape(n, 1)
    return (w1,                                # (n, d) f32
            b1_col,                            # (n, 1) f32
            ws.astype(jnp.bfloat16),           # (L, n, n) bf16
            bs.reshape(L, n, 1),               # (L, n, 1) f32
            wl.reshape(n, 1),                  # (n, 1) f32
            bl.reshape(1, 1))                  # (1, 1) f32


def net_forward(y, params, K, *, tile_b=4096):
    """Forward pass of `Net` as a single batch-tiled Pallas kernel."""
    w1f, b1c, wsb, bsc, wlc, bl2 = prepare_kernel_params(params, K)
    B, d = y.shape
    n = w1f.shape[0]
    L = wsb.shape[0]

    tile = _pick_tile(B, tile_b)
    num_tiles = pl.cdiv(B, tile)          # ragged last block handled by Pallas

    def resident(arr):
        zeros = (0,) * arr.ndim
        return pl.BlockSpec(arr.shape, lambda i: zeros)

    flops = 2 * B * (d * n + L * n * n + n)
    bytes_accessed = (B * d * 4 + B * 4                       # streamed in/out
                      + w1f.size * 4 + wsb.size * 2           # weights
                      + (b1c.size + bsc.size + wlc.size + bl2.size) * 4)

    # TODO(synk): if the producer of `y` can emit bf16 (fused upstream), accept
    # bf16 input here to halve the streamed HBM traffic.
    out = pl.pallas_call(
        _mlp_kernel,
        out_shape=jax.ShapeDtypeStruct((num_tiles, 1, tile), jnp.float32),
        grid=(num_tiles,),
        in_specs=[
            pl.BlockSpec((tile, d), lambda i: (i, 0)),        # streamed input
            resident(w1f), resident(b1c),                     # VMEM-resident
            resident(wsb), resident(bsc),
            resident(wlc), resident(bl2),
        ],
        out_specs=pl.BlockSpec((1, 1, tile), lambda i: (i, 0, 0)),
        compiler_params=pltpu.CompilerParams(
            dimension_semantics=("parallel",)),               # v7x megacore
        cost_estimate=pl.CostEstimate(flops=int(flops),
                                      transcendentals=int(B),
                                      bytes_accessed=int(bytes_accessed)),
    )(y, w1f, b1c, wsb, bsc, wlc, bl2)

    # (num_tiles, 1, tile) is row-major contiguous in the original batch order.
    return out.reshape(num_tiles * tile, 1)[:B]


def init_params(key, d, internal_neurons, hidden_layer_count):
    """Deterministic f32 params in torch.nn.Linear layout (out, in)."""
    n = internal_neurons
    L = hidden_layer_count + 1              # matches the PyTorch module
    keys = jax.random.split(key, 6)

    def uni(k, shape, fan_in):
        bound = 1.0 / jnp.sqrt(fan_in)
        return jax.random.uniform(k, shape, jnp.float32, -bound, bound)

    w1 = uni(keys[0], (n, d), d)            # fc1.weight
    b1 = uni(keys[1], (n,), d)              # fc1.bias
    ws = uni(keys[2], (L, n, n), n)         # stacked fcs[k].weight
    bs = uni(keys[3], (L, n), n)            # stacked fcs[k].bias
    wl = uni(keys[4], (1, n), n)            # fcl.weight
    bl = uni(keys[5], (1,), n)              # fcl.bias
    return (w1, b1, ws, bs, wl, bl)


def net_forward_ref_f32(y, params, K):
    """Pure-JAX f32 reference with the original PyTorch semantics."""
    w1, b1, ws, bs, wl, bl = params
    h = y - K
    h = jnp.maximum(h @ w1.T + b1, 0.0)
    for k in range(ws.shape[0]):
        h = jnp.maximum(h @ ws[k].T + bs[k], 0.0)
    return jax.nn.sigmoid(h @ wl.T + bl)


def net_forward_ref_mixed(y, params, K):
    """Pure-JAX reference mirroring the kernel's f32-fc1 / bf16-hidden math."""
    w1, b1, ws, bs, wl, bl = params
    b1e = b1 - K * jnp.sum(w1, axis=1)
    h = jnp.dot(y, w1.T, preferred_element_type=jnp.float32) + b1e
    h = jnp.maximum(h, 0.0)
    for k in range(ws.shape[0]):
        h = jnp.dot(h.astype(jnp.bfloat16), ws[k].T.astype(jnp.bfloat16),
                    preferred_element_type=jnp.float32) + bs[k]
        h = jnp.maximum(h, 0.0)
    out = jnp.sum(h * wl[0], axis=-1, keepdims=True) + bl
    return jax.nn.sigmoid(out)


if __name__ == "__main__":
    # Small shapes consistent with the module; tile_b=128 with B=512 gives a
    # 4-step grid so the tiled/pipelined (and megacore-shardable) path runs.
    B = 512                    # batch
    d = 32                     # input features
    internal_neurons = 32
    hidden_layer_count = 2     # -> 3 hidden (n -> n) layers inside the net
    K = 1.5

    key = jax.random.PRNGKey(0)
    k_in, k_par = jax.random.split(key)
    y = jax.random.normal(k_in, (B, d), dtype=jnp.float32)
    params = init_params(k_par, d, internal_neurons, hidden_layer_count)

    out = net_forward(y, params, K, tile_b=128)
    out = jax.block_until_ready(out)

    ref_mixed = net_forward_ref_mixed(y, params, K)   # same math as the kernel
    ref_f32 = net_forward_ref_f32(y, params, K)       # original f32 semantics

    assert out.shape == (B, 1)
    assert bool(jnp.all(jnp.isfinite(out)))
    assert jnp.allclose(out, ref_mixed, atol=1e-2, rtol=1e-2), "mismatch vs mixed ref"
    assert jnp.allclose(out, ref_f32, atol=3e-2, rtol=3e-2), "mismatch vs f32 ref"

    print("KERNEL_OK")
</pallas_src>

<mosaic_0001>
module attributes {stable_mosaic.version = 11 : i64} {
  func.func @_mlp_kernel(%arg0: i32, %arg1: memref<128x32xf32, #tpu.memory_space<vmem>>, %arg2: memref<32x32xf32, #tpu.memory_space<vmem>>, %arg3: memref<32x1xf32, #tpu.memory_space<vmem>>, %arg4: memref<3x32x32xbf16, #tpu.memory_space<vmem>>, %arg5: memref<3x32x1xf32, #tpu.memory_space<vmem>>, %arg6: memref<32x1xf32, #tpu.memory_space<vmem>>, %arg7: memref<1x1xf32, #tpu.memory_space<vmem>>, %arg8: memref<1x1x128xf32, #tpu.memory_space<vmem>>) attributes {dimension_semantics = [#tpu.dimension_semantics<parallel>], iteration_bounds = array<i64: 4>, scalar_prefetch = 0 : i64, scratch_operands = 0 : i64, tpu.core_type = #tpu.core_type<tc>, window_params = [{transform_indices = @transform_0, window_bounds = array<i64: 128, 32>}, {pipeline_mode = #tpu.pipeline_mode<synchronous>, transform_indices = @transform_1, window_bounds = array<i64: 32, 32>}, {pipeline_mode = #tpu.pipeline_mode<synchronous>, transform_indices = @transform_2, window_bounds = array<i64: 32, 1>}, {pipeline_mode = #tpu.pipeline_mode<synchronous>, transform_indices = @transform_3, window_bounds = array<i64: 3, 32, 32>}, {pipeline_mode = #tpu.pipeline_mode<synchronous>, transform_indices = @transform_4, window_bounds = array<i64: 3, 32, 1>}, {pipeline_mode = #tpu.pipeline_mode<synchronous>, transform_indices = @transform_5, window_bounds = array<i64: 32, 1>}, {pipeline_mode = #tpu.pipeline_mode<synchronous>, transform_indices = @transform_6, window_bounds = array<i64: 1, 1>}, {transform_indices = @transform_7, window_bounds = array<i64: 1, 1, 128>}]} {
    %c0 = arith.constant 0 : index
    %c0_0 = arith.constant 0 : index
    %0 = vector.load %arg1[%c0, %c0_0] : memref<128x32xf32, #tpu.memory_space<vmem>>, vector<128x32xf32>
    %c0_1 = arith.constant 0 : index
    %c0_2 = arith.constant 0 : index
    %1 = vector.load %arg2[%c0_1, %c0_2] : memref<32x32xf32, #tpu.memory_space<vmem>>, vector<32x32xf32>
    %cst = arith.constant dense<0.000000e+00> : vector<32x128xf32>
    %2 = tpu.matmul %1, %0, %cst {dimension_numbers = #tpu.dot_dimension_numbers<[1], [1], [0], [0], [0, 0, 1, 0], [], []>} : vector<32x32xf32>, vector<128x32xf32>, vector<32x128xf32> -> vector<32x128xf32>
    %c0_3 = arith.constant 0 : index
    %c0_4 = arith.constant 0 : index
    %3 = vector.load %arg3[%c0_3, %c0_4] : memref<32x1xf32, #tpu.memory_space<vmem>>, vector<32x1xf32>
    %4 = vector.broadcast %3 : vector<32x1xf32> to vector<32x128xf32>
    %5 = arith.addf %2, %4 : vector<32x128xf32>
    %cst_5 = arith.constant 0.000000e+00 : f32
    %6 = vector.broadcast %cst_5 : f32 to vector<32x128xf32>
    %7 = arith.maximumf %5, %6 : vector<32x128xf32>
    %c0_6 = arith.constant 0 : index
    %c0_7 = arith.constant 0 : index
    %c0_8 = arith.constant 0 : index
    %8 = vector.load %arg4[%c0_6, %c0_7, %c0_8] : memref<3x32x32xbf16, #tpu.memory_space<vmem>>, vector<1x32x32xbf16>
    %9 = vector.shape_cast %8 : vector<1x32x32xbf16> to vector<32x32xbf16>
    %10 = arith.truncf %7 : vector<32x128xf32> to vector<32x128xbf16>
    %cst_9 = arith.constant dense<0.000000e+00> : vector<32x128xf32>
    %11 = tpu.matmul %9, %10, %cst_9 {dimension_numbers = #tpu.dot_dimension_numbers<[1], [0], [0], [1], [0, 0, 1, 1], [], []>} : vector<32x32xbf16>, vector<32x128xbf16>, vector<32x128xf32> -> vector<32x128xf32>
    %c0_10 = arith.constant 0 : index
    %c0_11 = arith.constant 0 : index
    %c0_12 = arith.constant 0 : index
    %12 = vector.load %arg5[%c0_10, %c0_11, %c0_12] : memref<3x32x1xf32, #tpu.memory_space<vmem>>, vector<1x32x1xf32>
    %13 = vector.shape_cast %12 : vector<1x32x1xf32> to vector<32x1xf32>
    %14 = vector.broadcast %13 : vector<32x1xf32> to vector<32x128xf32>
    %15 = arith.addf %11, %14 : vector<32x128xf32>
    %cst_13 = arith.constant 0.000000e+00 : f32
    %16 = vector.broadcast %cst_13 : f32 to vector<32x128xf32>
    %17 = arith.maximumf %15, %16 : vector<32x128xf32>
    %c1 = arith.constant 1 : index
    %c0_14 = arith.constant 0 : index
    %c0_15 = arith.constant 0 : index
    %18 = vector.load %arg4[%c1, %c0_14, %c0_15] : memref<3x32x32xbf16, #tpu.memory_space<vmem>>, vector<1x32x32xbf16>
    %19 = vector.shape_cast %18 : vector<1x32x32xbf16> to vector<32x32xbf16>
    %20 = arith.truncf %17 : vector<32x128xf32> to vector<32x128xbf16>
    %cst_16 = arith.constant dense<0.000000e+00> : vector<32x128xf32>
    %21 = tpu.matmul %19, %20, %cst_16 {dimension_numbers = #tpu.dot_dimension_numbers<[1], [0], [0], [1], [0, 0, 1, 1], [], []>} : vector<32x32xbf16>, vector<32x128xbf16>, vector<32x128xf32> -> vector<32x128xf32>
    %c1_17 = arith.constant 1 : index
    %c0_18 = arith.constant 0 : index
    %c0_19 = arith.constant 0 : index
    %22 = vector.load %arg5[%c1_17, %c0_18, %c0_19] : memref<3x32x1xf32, #tpu.memory_space<vmem>>, vector<1x32x1xf32>
    %23 = vector.shape_cast %22 : vector<1x32x1xf32> to vector<32x1xf32>
    %24 = vector.broadcast %23 : vector<32x1xf32> to vector<32x128xf32>
    %25 = arith.addf %21, %24 : vector<32x128xf32>
    %cst_20 = arith.constant 0.000000e+00 : f32
    %26 = vector.broadcast %cst_20 : f32 to vector<32x128xf32>
    %27 = arith.maximumf %25, %26 : vector<32x128xf32>
    %c2 = arith.constant 2 : index
    %c0_21 = arith.constant 0 : index
    %c0_22 = arith.constant 0 : index
    %28 = vector.load %arg4[%c2, %c0_21, %c0_22] : memref<3x32x32xbf16, #tpu.memory_space<vmem>>, vector<1x32x32xbf16>
    %29 = vector.shape_cast %28 : vector<1x32x32xbf16> to vector<32x32xbf16>
    %30 = arith.truncf %27 : vector<32x128xf32> to vector<32x128xbf16>
    %cst_23 = arith.constant dense<0.000000e+00> : vector<32x128xf32>
    %31 = tpu.matmul %29, %30, %cst_23 {dimension_numbers = #tpu.dot_dimension_numbers<[1], [0], [0], [1], [0, 0, 1, 1], [], []>} : vector<32x32xbf16>, vector<32x128xbf16>, vector<32x128xf32> -> vector<32x128xf32>
    %c2_24 = arith.constant 2 : index
    %c0_25 = arith.constant 0 : index
    %c0_26 = arith.constant 0 : index
    %32 = vector.load %arg5[%c2_24, %c0_25, %c0_26] : memref<3x32x1xf32, #tpu.memory_space<vmem>>, vector<1x32x1xf32>
    %33 = vector.shape_cast %32 : vector<1x32x1xf32> to vector<32x1xf32>
    %34 = vector.broadcast %33 : vector<32x1xf32> to vector<32x128xf32>
    %35 = arith.addf %31, %34 : vector<32x128xf32>
    %cst_27 = arith.constant 0.000000e+00 : f32
    %36 = vector.broadcast %cst_27 : f32 to vector<32x128xf32>
    %37 = arith.maximumf %35, %36 : vector<32x128xf32>
    %c0_28 = arith.constant 0 : index
    %c0_29 = arith.constant 0 : index
    %38 = vector.load %arg6[%c0_28, %c0_29] : memref<32x1xf32, #tpu.memory_space<vmem>>, vector<32x1xf32>
    %39 = vector.broadcast %38 : vector<32x1xf32> to vector<32x128xf32>
    %40 = arith.mulf %37, %39 : vector<32x128xf32>
    %cst_30 = arith.constant dense<0.000000e+00> : vector<128xf32>
    %41 = vector.multi_reduction <add>, %40, %cst_30 [0] : vector<32x128xf32> to vector<128xf32>
    %42 = vector.shape_cast %41 : vector<128xf32> to vector<1x128xf32>
    %c0_31 = arith.constant 0 : index
    %c0_32 = arith.constant 0 : index
    %43 = vector.load %arg7[%c0_31, %c0_32] : memref<1x1xf32, #tpu.memory_space<vmem>>, vector<1x1xf32>
    %44 = vector.broadcast %43 : vector<1x1xf32> to vector<1x128xf32>
    %45 = arith.addf %42, %44 : vector<1x128xf32>
    %46 = arith.negf %45 : vector<1x128xf32>
    %47 = math.exp %46 : vector<1x128xf32>
    %cst_33 = arith.constant 1.000000e+00 : f32
    %48 = vector.broadcast %cst_33 : f32 to vector<1x128xf32>
    %49 = arith.addf %48, %47 : vector<1x128xf32>
    %50 = arith.divf %48, %49 : vector<1x128xf32>
    %51 = vector.shape_cast %50 : vector<1x128xf32> to vector<1x1x128xf32>
    %c0_34 = arith.constant 0 : index
    %c0_35 = arith.constant 0 : index
    %c0_36 = arith.constant 0 : index
    %52 = vector.load %arg8[%c0_34, %c0_35, %c0_36] : memref<1x1x128xf32, #tpu.memory_space<vmem>>, vector<1x1x128xf32>
    tpu.vector_store %arg8[%c0_34, %c0_35, %c0_36], %51 {strides = array<i32>} : memref<1x1x128xf32, #tpu.memory_space<vmem>>, vector<1x1x128xf32>,
    return
  }
  func.func @transform_0(%arg0: i32) -> (i32, i32) {
    %c0_i32 = arith.constant 0 : i32
    %c0_i32_0 = arith.constant 0 : i32
    return %arg0, %c0_i32 : i32, i32
  }
  func.func @transform_1(%arg0: i32) -> (i32, i32) {
    %c0_i32 = arith.constant 0 : i32
    %c0_i32_0 = arith.constant 0 : i32
    %c0_i32_1 = arith.constant 0 : i32
    return %c0_i32, %c0_i32_0 : i32, i32
  }
  func.func @transform_2(%arg0: i32) -> (i32, i32) {
    %c0_i32 = arith.constant 0 : i32
    %c0_i32_0 = arith.constant 0 : i32
    %c0_i32_1 = arith.constant 0 : i32
    return %c0_i32, %c0_i32_0 : i32, i32
  }
  func.func @transform_3(%arg0: i32) -> (i32, i32, i32) {
    %c0_i32 = arith.constant 0 : i32
    %c0_i32_0 = arith.constant 0 : i32
    %c0_i32_1 = arith.constant 0 : i32
    %c0_i32_2 = arith.constant 0 : i32
    return %c0_i32, %c0_i32_0, %c0_i32_1 : i32, i32, i32
  }
  func.func @transform_4(%arg0: i32) -> (i32, i32, i32) {
    %c0_i32 = arith.constant 0 : i32
    %c0_i32_0 = arith.constant 0 : i32
    %c0_i32_1 = arith.constant 0 : i32
    %c0_i32_2 = arith.constant 0 : i32
    return %c0_i32, %c0_i32_0, %c0_i32_1 : i32, i32, i32
  }
  func.func @transform_5(%arg0: i32) -> (i32, i32) {
    %c0_i32 = arith.constant 0 : i32
    %c0_i32_0 = arith.constant 0 : i32
    %c0_i32_1 = arith.constant 0 : i32
    return %c0_i32, %c0_i32_0 : i32, i32
  }
  func.func @transform_6(%arg0: i32) -> (i32, i32) {
    %c0_i32 = arith.constant 0 : i32
    %c0_i32_0 = arith.constant 0 : i32
    %c0_i32_1 = arith.constant 0 : i32
    return %c0_i32, %c0_i32_0 : i32, i32
  }
  func.func @transform_7(%arg0: i32) -> (i32, i32, i32) {
    %c0_i32 = arith.constant 0 : i32
    %c0_i32_0 = arith.constant 0 : i32
    %c0_i32_1 = arith.constant 0 : i32
    return %arg0, %c0_i32, %c0_i32_0 : i32, i32, i32
  }
}

</mosaic_0001>

<llo_original>
// kernel: tpu_custom_call.1
$region0: #{tpu_custom_call.1}
  #allocation0 [shape = 'u32[]', space=smem, size = 0x4, offset = 0x4, fixed_abs, tag = 'smem constant byte address 0x4 - core index']
  #allocation1 [shape = 'u32[72,128]{1,0:T(1,128)}', space=vmem, size = 0x9000, scoped, tag = 'internal scratch']
  #allocation2 [shape = 'f32[1,1]{1,0:T(1,128)S(1)}', space=vmem, size = 0x200, scoped, tag = 'scoped memory for tpu_custom_call.1']
  %s0 = inlined_call_operand.vmem [shape: f32[512,32], index: 0, kind: input, shape index: {}]
  %s1 = inlined_call_operand.vmem [shape: f32[32,32], index: 1, kind: input, shape index: {}]
  %s2 = inlined_call_operand.vmem [shape: f32[32,1], index: 2, kind: input, shape index: {}]
  %s3 = inlined_call_operand.vmem [shape: bf16[3,32,32], index: 3, kind: input, shape index: {}]
  %s4 = inlined_call_operand.vmem [shape: f32[3,32,1], index: 4, kind: input, shape index: {}]
  %s5 = inlined_call_operand.vmem [shape: f32[32,1], index: 5, kind: input, shape index: {}]
  %s6 = inlined_call_operand.<no memory space> [shape: f32[1,1], index: 6, kind: input, shape index: {}]
  %s7 = inlined_call_operand.hbm [shape: f32[4,1,128], index: 7, kind: output, shape index: {}]
  %s8 = sld [smem:[#allocation0]]
  $region61: #{tpu_custom_call.1} parent=0
    _
  %s10 = ssub.s32 1, %s8
  %s11 = scalar_select 0, %s10, %s8
  %v12 = vstv %s6
  %13 = vst [vmem:[#allocation2] sm:$0x1] %v12
  $region1: #{tpu_custom_call.1} parent=0
    #allocation3 [shape = 'u8[1024]{0}', space=vmem, size = 0x400, scoped, tag = 'output window, operand 0']
    #allocation4 [shape = 's32[2]{0}', space=sflag, size = 0x8, scoped, tag = 'scoped memory for tpu_custom_call.1']
    %14 = vsyncpa [#allocation4], 0
    %s15 = scalar_lea.sflag [#allocation4], 1
    %16 = vsyncpa %s15, 0
    loop: start=0, step=1, limit=6
    $region2: #{tpu_custom_call.1} parent=1 // loop_pre_header
      _
    $region3: #{tpu_custom_call.1} parent=1 // loop_header
      %s18 = sphi 0, %s22
      %p19 = scmp.ge.s32.totalorder %s18, 6
      %s28 = sphi 0, %s30
      %s31 = sphi 0, %s28
      %s32 = sphi 0, %s31
      %s48 = sphi 0, %s32
      %s52 = sphi 0, %s52
      %s54 = sphi 0, %s52
      %s55 = sphi 0, %s54
      %s69 = sphi 0, %s55
      %s73 = sphi 0, %s73
      %s75 = sphi 0, %s73
      %s76 = sphi 0, %s75
      %s90 = sphi 0, %s76
      %s94 = sphi 0, %s94
      %s96 = sphi 0, %s94
      %s97 = sphi 0, %s96
      %s111 = sphi 0, %s97
      %s115 = sphi 0, %s115
      %s117 = sphi 0, %s115
      %s118 = sphi 0, %s117
      %s132 = sphi 0, %s118
      %s136 = sphi 0, %s136
      %s138 = sphi 0, %s136
      %s139 = sphi 0, %s138
      %s153 = sphi 0, %s139
      %s157 = sphi 0, %s157
      %s159 = sphi 0, %s157
      %s160 = sphi 0, %s159
      %s174 = sphi 0, %s160
      %s180 = sphi 0, %s182
      %s183 = sphi 0, %s180
      %s184 = sphi 0, %s183
      %s200 = sphi 0, %s184
    $region4: #{tpu_custom_call.1} parent=1 // loop_header_branch
      %21 = sbr.rel (%p19) target = $region8
    $region5: #{tpu_custom_call.1} parent=1 // loop_body
      %s23 = ssub.s32 %s18, 1
      %s24 = ssub.s32 %s18, 2
      %s25 = sadd.s32 %s18, 1
      %s26 = ssub.s32 %s18, %s25
      %p27 = scmp.eq.s32.totalorder %s26, 0
      %s29 = sadd.s32 %s28, 1
      %s30 = scalar_select %p27, %s28, %s29
      %p33 = pneg %p27
      %p34 = scmp.eq.s32.totalorder %s18, 3
      %p35 = por %p33, %p34
      %p36 = scmp.ne.s32.totalorder %s28, %s31
      %p37 = scmp.eq.s32.totalorder %s18, 0
      %p38 = por %p36, %p37
      %p39 = scmp.ne.s32.totalorder %s28, %s31
      %p40 = scmp.eq.s32.totalorder %s23, 3
      %p41 = por %p39, %p40
      %p42 = scmp.ne.s32.totalorder %s31, %s32
      %p43 = scmp.eq.s32.totalorder %s23, 0
      %p44 = por %p42, %p43
      %p45 = scmp.ne.s32.totalorder %s31, %s32
      %p46 = scmp.eq.s32.totalorder %s24, 3
      %p47 = por %p45, %p46
      %p49 = scmp.ne.s32.totalorder %s32, %s48
      %p50 = scmp.eq.s32.totalorder %s24, 0
      %p51 = por %p49, %p50
      %s53 = sadd.s32 %s52, 1
      %p56 = scmp.eq.s32.totalorder %s18, 3
      %p57 = scmp.ne.s32.totalorder %s52, %s54
      %p58 = scmp.eq.s32.totalorder %s18, 0
      %p59 = por %p57, %p58
      %p60 = scmp.ne.s32.totalorder %s52, %s54
      %p61 = scmp.eq.s32.totalorder %s23, 3
      %p62 = por %p60, %p61
      %p63 = scmp.ne.s32.totalorder %s54, %s55
      %p64 = scmp.eq.s32.totalorder %s23, 0
      %p65 = por %p63, %p64
      %p66 = scmp.ne.s32.totalorder %s54, %s55
      %p67 = scmp.eq.s32.totalorder %s24, 3
      %p68 = por %p66, %p67
      %p70 = scmp.ne.s32.totalorder %s55, %s69
      %p71 = scmp.eq.s32.totalorder %s24, 0
      %p72 = por %p70, %p71
      %s74 = sadd.s32 %s73, 1
      %p77 = scmp.eq.s32.totalorder %s18, 3
      %p78 = scmp.ne.s32.totalorder %s73, %s75
      %p79 = scmp.eq.s32.totalorder %s18, 0
      %p80 = por %p78, %p79
      %p81 = scmp.ne.s32.totalorder %s73, %s75
      %p82 = scmp.eq.s32.totalorder %s23, 3
      %p83 = por %p81, %p82
      %p84 = scmp.ne.s32.totalorder %s75, %s76
      %p85 = scmp.eq.s32.totalorder %s23, 0
      %p86 = por %p84, %p85
      %p87 = scmp.ne.s32.totalorder %s75, %s76
      %p88 = scmp.eq.s32.totalorder %s24, 3
      %p89 = por %p87, %p88
      %p91 = scmp.ne.s32.totalorder %s76, %s90
      %p92 = scmp.eq.s32.totalorder %s24, 0
      %p93 = por %p91, %p92
      %s95 = sadd.s32 %s94, 1
      %p98 = scmp.eq.s32.totalorder %s18, 3
      %p99 = scmp.ne.s32.totalorder %s94, %s96
      %p100 = scmp.eq.s32.totalorder %s18, 0
      %p101 = por %p99, %p100
      %p102 = scmp.ne.s32.totalorder %s94, %s96
      %p103 = scmp.eq.s32.totalorder %s23, 3
      %p104 = por %p102, %p103
      %p105 = scmp.ne.s32.totalorder %s96, %s97
      %p106 = scmp.eq.s32.totalorder %s23, 0
      %p107 = por %p105, %p106
      %p108 = scmp.ne.s32.totalorder %s96, %s97
      %p109 = scmp.eq.s32.totalorder %s24, 3
      %p110 = por %p108, %p109
      %p112 = scmp.ne.s32.totalorder %s97, %s111
      %p113 = scmp.eq.s32.totalorder %s24, 0
      %p114 = por %p112, %p113
      %s116 = sadd.s32 %s115, 1
      %p119 = scmp.eq.s32.totalorder %s18, 3
      %p120 = scmp.ne.s32.totalorder %s115, %s117
      %p121 = scmp.eq.s32.totalorder %s18, 0
      %p122 = por %p120, %p121
      %p123 = scmp.ne.s32.totalorder %s115, %s117
      %p124 = scmp.eq.s32.totalorder %s23, 3
      %p125 = por %p123, %p124
      %p126 = scmp.ne.s32.totalorder %s117, %s118
      %p127 = scmp.eq.s32.totalorder %s23, 0
      %p128 = por %p126, %p127
      %p129 = scmp.ne.s32.totalorder %s117, %s118
      %p130 = scmp.eq.s32.totalorder %s24, 3
      %p131 = por %p129, %p130
      %p133 = scmp.ne.s32.totalorder %s118, %s132
      %p134 = scmp.eq.s32.totalorder %s24, 0
      %p135 = por %p133, %p134
      %s137 = sadd.s32 %s136, 1
      %p140 = scmp.eq.s32.totalorder %s18, 3
      %p141 = scmp.ne.s32.totalorder %s136, %s138
      %p142 = scmp.eq.s32.totalorder %s18, 0
      %p143 = por %p141, %p142
      %p144 = scmp.ne.s32.totalorder %s136, %s138
      %p145 = scmp.eq.s32.totalorder %s23, 3
      %p146 = por %p144, %p145
      %p147 = scmp.ne.s32.totalorder %s138, %s139
      %p148 = scmp.eq.s32.totalorder %s23, 0
      %p149 = por %p147, %p148
      %p150 = scmp.ne.s32.totalorder %s138, %s139
      %p151 = scmp.eq.s32.totalorder %s24, 3
      %p152 = por %p150, %p151
      %p154 = scmp.ne.s32.totalorder %s139, %s153
      %p155 = scmp.eq.s32.totalorder %s24, 0
      %p156 = por %p154, %p155
      %s158 = sadd.s32 %s157, 1
      %p161 = scmp.eq.s32.totalorder %s18, 3
      %p162 = scmp.ne.s32.totalorder %s157, %s159
      %p163 = scmp.eq.s32.totalorder %s18, 0
      %p164 = por %p162, %p163
      %p165 = scmp.ne.s32.totalorder %s157, %s159
      %p166 = scmp.eq.s32.totalorder %s23, 3
      %p167 = por %p165, %p166
      %p168 = scmp.ne.s32.totalorder %s159, %s160
      %p169 = scmp.eq.s32.totalorder %s23, 0
      %p170 = por %p168, %p169
      %p171 = scmp.ne.s32.totalorder %s159, %s160
      %p172 = scmp.eq.s32.totalorder %s24, 3
      %p173 = por %p171, %p172
      %p175 = scmp.ne.s32.totalorder %s160, %s174
      %p176 = scmp.eq.s32.totalorder %s24, 0
      %p177 = por %p175, %p176
      %s178 = ssub.s32 %s18, %s25
      %p179 = scmp.eq.s32.totalorder %s178, 0
      %s181 = sadd.s32 %s180, 1
      %s182 = scalar_select %p179, %s180, %s181
      %p185 = pneg %p179
      %p186 = scmp.eq.s32.totalorder %s18, 3
      %p187 = por %p185, %p186
      %p188 = scmp.ne.s32.totalorder %s180, %s183
      %p189 = scmp.eq.s32.totalorder %s18, 0
      %p190 = por %p188, %p189
      %p191 = scmp.ne.s32.totalorder %s180, %s183
      %p192 = scmp.eq.s32.totalorder %s23, 3
      %p193 = por %p191, %p192
      %p194 = scmp.ne.s32.totalorder %s183, %s184
      %p195 = scmp.eq.s32.totalorder %s23, 0
      %p196 = por %p194, %p195
      %p197 = scmp.ne.s32.totalorder %s183, %s184
      %p198 = scmp.eq.s32.totalorder %s24, 3
      %p199 = por %p197, %p198
      %p201 = scmp.ne.s32.totalorder %s184, %s200
      %p202 = scmp.eq.s32.totalorder %s24, 0
      %p203 = por %p201, %p202
      %p204 = scmp.le.s32.totalorder 1, %s18
      %p205 = scmp.lt.s32.totalorder %s18, 5
      %p206 = pnand %p204, %p205
      %p207 = pneg %p206
      // Predicated region
      $region9: #{tpu_custom_call.1} parent=5 // pred_check
        _
      $region10: #{tpu_custom_call.1} parent=5 // pred_check_branch
        %209 = sbr.rel (%p206) target = $region12
      $region11: #{tpu_custom_call.1} parent=5 // pred_region
        %s210 = ssub.s32 %s18, 1
        // Predicated region
        $region13: #{tpu_custom_call.1} parent=11 // pred_check
          %p211 = pneg %p65
        $region14: #{tpu_custom_call.1} parent=11 // pred_check_branch
          %213 = sbr.rel (%p211) target = $region16
        $region15: #{tpu_custom_call.1} parent=11 // pred_region
          _
        $region16: #{tpu_custom_call.1} parent=11 // pred_fallthru
          _
        // Predicated region
        $region17: #{tpu_custom_call.1} parent=11 // pred_check
          %p214 = pneg %p86
        $region18: #{tpu_custom_call.1} parent=11 // pred_check_branch
          %216 = sbr.rel (%p214) target = $region20
        $region19: #{tpu_custom_call.1} parent=11 // pred_region
          _
        $region20: #{tpu_custom_call.1} parent=11 // pred_fallthru
          _
        // Predicated region
        $region21: #{tpu_custom_call.1} parent=11 // pred_check
          %p217 = pneg %p107
        $region22: #{tpu_custom_call.1} parent=11 // pred_check_branch
          %219 = sbr.rel (%p217) target = $region24
        $region23: #{tpu_custom_call.1} parent=11 // pred_region
          _
        $region24: #{tpu_custom_call.1} parent=11 // pred_fallthru
          _
        // Predicated region
        $region25: #{tpu_custom_call.1} parent=11 // pred_check
          %p220 = pneg %p128
        $region26: #{tpu_custom_call.1} parent=11 // pred_check_branch
          %222 = sbr.rel (%p220) target = $region28
        $region27: #{tpu_custom_call.1} parent=11 // pred_region
          _
        $region28: #{tpu_custom_call.1} parent=11 // pred_fallthru
          _
        // Predicated region
        $region29: #{tpu_custom_call.1} parent=11 // pred_check
          %p223 = pneg %p149
        $region30: #{tpu_custom_call.1} parent=11 // pred_check_branch
          %225 = sbr.rel (%p223) target = $region32
        $region31: #{tpu_custom_call.1} parent=11 // pred_region
          _
        $region32: #{tpu_custom_call.1} parent=11 // pred_fallthru
          _
        // Predicated region
        $region33: #{tpu_custom_call.1} parent=11 // pred_check
          %p226 = pneg %p170
        $region34: #{tpu_custom_call.1} parent=11 // pred_check_branch
          %228 = sbr.rel (%p226) target = $region36
        $region35: #{tpu_custom_call.1} parent=11 // pred_region
          _
        $region36: #{tpu_custom_call.1} parent=11 // pred_fallthru
          _
      $region12: #{tpu_custom_call.1} parent=5 // pred_fallthru
        _
      %p229 = scmp.lt.s32.totalorder %s18, 4
      // Predicated region
      $region37: #{tpu_custom_call.1} parent=5 // pred_check
        %p230 = pneg %p229
      $region38: #{tpu_custom_call.1} parent=5 // pred_check_branch
        %232 = sbr.rel (%p230) target = $region40
      $region39: #{tpu_custom_call.1} parent=5 // pred_region
        // Predicated region
        $region41: #{tpu_custom_call.1} parent=39 // pred_check
          %p233 = pneg %p38
        $region42: #{tpu_custom_call.1} parent=39 // pred_check_branch
          %235 = sbr.rel (%p233) target = $region44
        $region43: #{tpu_custom_call.1} parent=39 // pred_region
          %s236 = smul.u32 16, %s18
          %p237 = scmp.lt.s32.totalorder %s236, 63
          %s238 = scalar_select %p237, %s236, 63
          %s239 = smul.addr %s238, 8
          %s240 = scalar_lea.vmem %s0, %s239
          %s241 = smul.u32 16, %s18
        $region44: #{tpu_custom_call.1} parent=39 // pred_fallthru
          _
      $region40: #{tpu_custom_call.1} parent=5 // pred_fallthru
        _
      %p242 = scmp.le.s32.totalorder 1, %s18
      %p243 = scmp.lt.s32.totalorder %s18, 5
      %p244 = pnand %p242, %p243
      %p245 = pneg %p244
      // Predicated region
      $region45: #{tpu_custom_call.1} parent=5 // pred_check
        _
      $region46: #{tpu_custom_call.1} parent=5 // pred_check_branch
        %247 = sbr.rel (%p244) target = $region48
      $region47: #{tpu_custom_call.1} parent=5 // pred_region
        %s248 = ssub.s32 %s18, 1
        %s249 = smul.u32 16, %s23
        %p250 = scmp.lt.s32.totalorder %s249, 63
        %s251 = scalar_select %p250, %s249, 63
        %s252 = smul.addr %s251, 8
        %s253 = scalar_lea.vmem %s0, %s252
        %p254 = pneg %p44
        %p255 = pneg %p41
        %p256 = pneg %p65
        %p257 = pneg %p62
        %p258 = pneg %p86
        %p259 = pneg %p83
        %p260 = pneg %p107
        %p261 = pneg %p104
        %p262 = pneg %p128
        %p263 = pneg %p125
        %p264 = pneg %p149
        %p265 = pneg %p146
        %p266 = pneg %p170
        %p267 = pneg %p167
        %p268 = pneg %p196
        %p269 = pneg %p193
        %s270 = sand.u32 %s183, 1
        %s271 = scalar_lea.sflag [#allocation4], %s270
        %s272 = sand.u32 %s183, 1
        %s273 = scalar_lea.vmem [#allocation3], %s272
        %s274 = smul.u32 16, %s23
        %p275 = scmp.lt.s32.totalorder %s274, 63
        %s276 = scalar_select %p275, %s274, 63
        %s277 = smul.addr %s276, 8
        %s278 = scalar_lea.vmem %s0, %s277
        %s279 = smul.u32 16, %s23
        %v281 = vld [vmem:[%s278] sm:$0xff]
        %v282 = vld [vmem:[%s278 + $0x8] sm:$0xff]
        %v283 = vld [vmem:[%s278 + $0x10] sm:$0xff]
        %v284 = vld [vmem:[%s278 + $0x18] sm:$0xff]
        %v285 = vld [vmem:[%s278 + $0x20] sm:$0xff]
        %v286 = vld [vmem:[%s278 + $0x28] sm:$0xff]
        %v287 = vld [vmem:[%s278 + $0x30] sm:$0xff]
        %v288 = vld [vmem:[%s278 + $0x38] sm:$0xff]
        %v289 = vld [vmem:[%s278 + $0x40] sm:$0xff]
        %v290 = vld [vmem:[%s278 + $0x48] sm:$0xff]
        %v291 = vld [vmem:[%s278 + $0x50] sm:$0xff]
        %v292 = vld [vmem:[%s278 + $0x58] sm:$0xff]
        %v293 = vld [vmem:[%s278 + $0x60] sm:$0xff]
        %v294 = vld [vmem:[%s278 + $0x68] sm:$0xff]
        %v295 = vld [vmem:[%s278 + $0x70] sm:$0xff]
        %v296 = vld [vmem:[%s278 + $0x78] sm:$0xff]
        %v297 = vld [vmem:[%s1] sm:$0xff]
        %v298 = vld [vmem:[%s1 + $0x8] sm:$0xff]
        %v299 = vld [vmem:[%s1 + $0x10] sm:$0xff]
        %v300 = vld [vmem:[%s1 + $0x18] sm:$0xff]
        %v301 = vld [vmem:[%s2] sm:$0xff]
        %v302 = vld [vmem:[%s2 + $0x8] sm:$0xff]
        %v303 = vld [vmem:[%s2 + $0x10] sm:$0xff]
        %v304 = vld [vmem:[%s2 + $0x18] sm:$0xff]
        %306 = vset.pattern.permute.xlu0 0
        %307 = vperm.xlu0 %306, %v301
        %v308 = vpop.permute.xlu0 %307
        %311 = vset.pattern.permute.xlu0 0
        %312 = vperm.xlu0 %311, %v302
        %v313 = vpop.permute.xlu0 %312
        %316 = vset.pattern.permute.xlu0 0
        %317 = vperm.xlu0 %316, %v303
        %v318 = vpop.permute.xlu0 %317
        %321 = vset.pattern.permute.xlu0 0
        %322 = vperm.xlu0 %321, %v304
        %v323 = vpop.permute.xlu0 %322
        %vm325 = vcmask 261120
        %v327 = vsel %vm325, %v297, 0
        %v330 = vsel %vm325, %v298, 0
        %v333 = vsel %vm325, %v299, 0
        %v336 = vsel %vm325, %v300, 0
        %v339 = vsel %vm325, %v281, 0
        %v342 = vsel %vm325, %v282, 0
        %v345 = vsel %vm325, %v283, 0
        %v348 = vsel %vm325, %v284, 0
        %v351 = vsel %vm325, %v285, 0
        %v354 = vsel %vm325, %v286, 0
        %v357 = vsel %vm325, %v287, 0
        %v360 = vsel %vm325, %v288, 0
        %v363 = vsel %vm325, %v289, 0
        %v366 = vsel %vm325, %v290, 0
        %v369 = vsel %vm325, %v291, 0
        %v372 = vsel %vm325, %v292, 0
        %v375 = vsel %vm325, %v293, 0
        %v378 = vsel %vm325, %v294, 0
        %v381 = vsel %vm325, %v295, 0
        %v384 = vsel %vm325, %v296, 0
        %386 = vmatpush.xpose.msra.mxu0 %v384
        %387 = vmatpush.xpose.msra.mxu0 %v381
        %388 = vmatpush.xpose.msra.mxu0 %v378
        %389 = vmatpush.xpose.msra.mxu0 %v375
        %390 = vmatpush.xpose.msra.mxu0 %v372
        %391 = vmatpush.xpose.msra.mxu0 %v369
        %392 = vmatpush.xpose.msra.mxu0 %v366
        %393 = vmatpush.xpose.msra.mxu0 %v363
        %394 = vmatpush.xpose.msra.mxu0 %v360
        %395 = vmatpush.xpose.msra.mxu0 %v357
        %396 = vmatpush.xpose.msra.mxu0 %v354
        %397 = vmatpush.xpose.msra.mxu0 %v351
        %398 = vmatpush.xpose.msra.mxu0 %v348
        %399 = vmatpush.xpose.msra.mxu0 %v345
        %400 = vmatpush.xpose.msra.mxu0 %v342
        %401 = vmatpush.xpose.msra.mxu0 %v339
        %402 = vmatmul.f32.gmra.mxu0 %v327
        %v403 = vpop.f32.mrf.mxu0
        %v404 = vadd.f32 %v308, %v403
        %405 = vmatmul.f32.gmra.mxu0 %v330
        %v406 = vpop.f32.mrf.mxu0
        %v407 = vadd.f32 %v313, %v406
        %408 = vmatmul.f32.gmra.mxu0 %v333
        %v409 = vpop.f32.mrf.mxu0
        %v410 = vadd.f32 %v318, %v409
        %411 = vmatmul.f32.gmra.mxu0 %v336
        %v412 = vpop.f32.mrf.mxu0
        %v413 = vadd.f32 %v323, %v412
        %414 = vdwg.mxu0
        %v415 = vmax.f32 %v404, 0.0
        %v416 = vmax.f32 %v407, 0.0
        %v417 = vmax.f32 %v410, 0.0
        %v418 = vmax.f32 %v413, 0.0
        %v419 = vld [vmem:[%s3] sm:$0xf]
        %v420 = vld [vmem:[%s3 + $0x4] sm:$0xf]
        %v421 = vld [vmem:[%s3 + $0x8] sm:$0xf]
        %v422 = vld [vmem:[%s3 + $0xc] sm:$0xf]
        %v423 = vpack.c.bf16 %v416, %v415
        %v424 = vpack.c.bf16 %v418, %v417
        %v425 = vld [vmem:[%s4] sm:$0xff]
        %v426 = vld [vmem:[%s4 + $0x8] sm:$0xff]
        %v427 = vld [vmem:[%s4 + $0x10] sm:$0xff]
        %v428 = vld [vmem:[%s4 + $0x18] sm:$0xff]
        %430 = vset.pattern.permute.xlu0 0
        %431 = vperm.xlu0 %430, %v425
        %v432 = vpop.permute.xlu0 %431
        %435 = vset.pattern.permute.xlu0 0
        %436 = vperm.xlu0 %435, %v426
        %v437 = vpop.permute.xlu0 %436
        %440 = vset.pattern.permute.xlu0 0
        %441 = vperm.xlu0 %440, %v427
        %v442 = vpop.permute.xlu0 %441
        %445 = vset.pattern.permute.xlu0 0
        %446 = vperm.xlu0 %445, %v428
        %v447 = vpop.permute.xlu0 %446
        %v453 = vunpack.c.l.b16 %v419
        %v454 = vunpack.c.l.b16 %v420
        %v455 = vunpack.c.l.b16 %v421
        %v456 = vunpack.c.l.b16 %v422
        %v457 = vpack.c.b16 %v454, %v453
        %v458 = vpack.c.b16 %v456, %v455
        %v460 = vsel %vm325, %v457, 0
        %v463 = vsel %vm325, %v458, 0
        %465 = vmatpush.bf16.msra.mxu0 0
        %466 = vmatpush.bf16.msra.mxu0 0
        %467 = vmatpush.bf16.msra.mxu0 0
        %468 = vmatpush.bf16.msra.mxu0 0
        %469 = vmatpush.bf16.msra.mxu0 0
        %470 = vmatpush.bf16.msra.mxu0 0
        %471 = vmatpush.bf16.msra.mxu0 %v424
        %472 = vmatpush.bf16.msra.mxu0 %v423
        %473 = vmatmul.bf16.gmra.mxu0 %v460
        %v474 = vpop.f32.mrf.mxu0
        %v475 = vadd.f32 %v432, %v474
        %v476 = vpop.f32.mrf.mxu0
        %v477 = vadd.f32 %v437, %v476
        %478 = vmatmul.bf16.gmra.mxu0 %v463
        %v479 = vpop.f32.mrf.mxu0
        %v480 = vadd.f32 %v442, %v479
        %v481 = vpop.f32.mrf.mxu0
        %v482 = vadd.f32 %v447, %v481
        %483 = vdwg.mxu0
        %v484 = vmax.f32 %v475, 0.0
        %v485 = vmax.f32 %v477, 0.0
        %v486 = vmax.f32 %v480, 0.0
        %v487 = vmax.f32 %v482, 0.0
        %s488 = scalar_lea.vmem %s3, 16
        %v489 = vld [vmem:[%s488] sm:$0xf]
        %v490 = vld [vmem:[%s488 + $0x4] sm:$0xf]
        %v491 = vld [vmem:[%s488 + $0x8] sm:$0xf]
        %v492 = vld [vmem:[%s488 + $0xc] sm:$0xf]
        %v493 = vpack.c.bf16 %v485, %v484
        %v494 = vpack.c.bf16 %v487, %v486
        %s495 = scalar_lea.vmem %s4, 32
        %v496 = vld [vmem:[%s495] sm:$0xff]
        %v497 = vld [vmem:[%s495 + $0x8] sm:$0xff]
        %v498 = vld [vmem:[%s495 + $0x10] sm:$0xff]
        %v499 = vld [vmem:[%s495 + $0x18] sm:$0xff]
        %501 = vset.pattern.permute.xlu0 0
        %502 = vperm.xlu0 %501, %v496
        %v503 = vpop.permute.xlu0 %502
        %506 = vset.pattern.permute.xlu0 0
        %507 = vperm.xlu0 %506, %v497
        %v508 = vpop.permute.xlu0 %507
        %511 = vset.pattern.permute.xlu0 0
        %512 = vperm.xlu0 %511, %v498
        %v513 = vpop.permute.xlu0 %512
        %516 = vset.pattern.permute.xlu0 0
        %517 = vperm.xlu0 %516, %v499
        %v518 = vpop.permute.xlu0 %517
        %v524 = vunpack.c.l.b16 %v489
        %v525 = vunpack.c.l.b16 %v490
        %v526 = vunpack.c.l.b16 %v491
        %v527 = vunpack.c.l.b16 %v492
        %v528 = vpack.c.b16 %v525, %v524
        %v529 = vpack.c.b16 %v527, %v526
        %v531 = vsel %vm325, %v528, 0
        %v534 = vsel %vm325, %v529, 0
        %536 = vmatpush.bf16.msra.mxu0 0
        %537 = vmatpush.bf16.msra.mxu0 0
        %538 = vmatpush.bf16.msra.mxu0 0
        %539 = vmatpush.bf16.msra.mxu0 0
        %540 = vmatpush.bf16.msra.mxu0 0
        %541 = vmatpush.bf16.msra.mxu0 0
        %542 = vmatpush.bf16.msra.mxu0 %v494
        %543 = vmatpush.bf16.msra.mxu0 %v493
        %544 = vmatmul.bf16.gmra.mxu0 %v531
        %v545 = vpop.f32.mrf.mxu0
        %v546 = vadd.f32 %v503, %v545
        %v547 = vpop.f32.mrf.mxu0
        %v548 = vadd.f32 %v508, %v547
        %549 = vmatmul.bf16.gmra.mxu0 %v534
        %v550 = vpop.f32.mrf.mxu0
        %v551 = vadd.f32 %v513, %v550
        %v552 = vpop.f32.mrf.mxu0
        %v553 = vadd.f32 %v518, %v552
        %554 = vdwg.mxu0
        %v555 = vmax.f32 %v546, 0.0
        %v556 = vmax.f32 %v548, 0.0
        %v557 = vmax.f32 %v551, 0.0
        %v558 = vmax.f32 %v553, 0.0
        %s559 = scalar_lea.vmem %s3, 32
        %v560 = vld [vmem:[%s559] sm:$0xf]
        %v561 = vld [vmem:[%s559 + $0x4] sm:$0xf]
        %v562 = vld [vmem:[%s559 + $0x8] sm:$0xf]
        %v563 = vld [vmem:[%s559 + $0xc] sm:$0xf]
        %v564 = vpack.c.bf16 %v556, %v555
        %v565 = vpack.c.bf16 %v558, %v557
        %s566 = scalar_lea.vmem %s4, 64
        %v567 = vld [vmem:[%s566] sm:$0xff]
        %v568 = vld [vmem:[%s566 + $0x8] sm:$0xff]
        %v569 = vld [vmem:[%s566 + $0x10] sm:$0xff]
        %v570 = vld [vmem:[%s566 + $0x18] sm:$0xff]
        %572 = vset.pattern.permute.xlu0 0
        %573 = vperm.xlu0 %572, %v567
        %v574 = vpop.permute.xlu0 %573
        %577 = vset.pattern.permute.xlu0 0
        %578 = vperm.xlu0 %577, %v568
        %v579 = vpop.permute.xlu0 %578
        %582 = vset.pattern.permute.xlu0 0
        %583 = vperm.xlu0 %582, %v569
        %v584 = vpop.permute.xlu0 %583
        %587 = vset.pattern.permute.xlu0 0
        %588 = vperm.xlu0 %587, %v570
        %v589 = vpop.permute.xlu0 %588
        %v595 = vunpack.c.l.b16 %v560
        %v596 = vunpack.c.l.b16 %v561
        %v597 = vunpack.c.l.b16 %v562
        %v598 = vunpack.c.l.b16 %v563
        %v599 = vpack.c.b16 %v596, %v595
        %v600 = vpack.c.b16 %v598, %v597
        %v602 = vsel %vm325, %v599, 0
        %v605 = vsel %vm325, %v600, 0
        %607 = vmatpush.bf16.msra.mxu0 0
        %608 = vmatpush.bf16.msra.mxu0 0
        %609 = vmatpush.bf16.msra.mxu0 0
        %610 = vmatpush.bf16.msra.mxu0 0
        %611 = vmatpush.bf16.msra.mxu0 0
        %612 = vmatpush.bf16.msra.mxu0 0
        %613 = vmatpush.bf16.msra.mxu0 %v565
        %614 = vmatpush.bf16.msra.mxu0 %v564
        %615 = vmatmul.bf16.gmra.mxu0 %v602
        %v616 = vpop.f32.mrf.mxu0
        %v617 = vadd.f32 %v574, %v616
        %v618 = vpop.f32.mrf.mxu0
        %v619 = vadd.f32 %v579, %v618
        %620 = vmatmul.bf16.gmra.mxu0 %v605
        %v621 = vpop.f32.mrf.mxu0
        %v622 = vadd.f32 %v584, %v621
        %v623 = vpop.f32.mrf.mxu0
        %v624 = vadd.f32 %v589, %v623
        %625 = vdwg.mxu0
        %v626 = vmax.f32 %v617, 0.0
        %v627 = vmax.f32 %v619, 0.0
        %v628 = vmax.f32 %v622, 0.0
        %v629 = vmax.f32 %v624, 0.0
        %v630 = vld [vmem:[%s5] sm:$0xff]
        %v631 = vld [vmem:[%s5 + $0x8] sm:$0xff]
        %v632 = vld [vmem:[%s5 + $0x10] sm:$0xff]
        %v633 = vld [vmem:[%s5 + $0x18] sm:$0xff]
        %635 = vset.pattern.permute.xlu0 0
        %636 = vperm.xlu0 %635, %v630
        %v637 = vpop.permute.xlu0 %636
        %640 = vset.pattern.permute.xlu0 0
        %641 = vperm.xlu0 %640, %v631
        %v642 = vpop.permute.xlu0 %641
        %645 = vset.pattern.permute.xlu0 0
        %646 = vperm.xlu0 %645, %v632
        %v647 = vpop.permute.xlu0 %646
        %650 = vset.pattern.permute.xlu0 0
        %651 = vperm.xlu0 %650, %v633
        %v652 = vpop.permute.xlu0 %651
        %v654 = vmul.f32 %v626, %v637
        %v655 = vmul.f32 %v627, %v642
        %v656 = vmul.f32 %v628, %v647
        %v657 = vmul.f32 %v629, %v652
        %v658 = vadd.f32 %v654, %v655
        %v659 = vadd.f32 %v658, %v656
        %v660 = vadd.f32 %v659, %v657
        %v661 = vrot.slane %v660, 4
        %v662 = vadd.f32 %v660, %v661
        %v663 = vrot.slane %v662, 2
        %v664 = vadd.f32 %v662, %v663
        %v665 = vrot.slane %v664, 1
        %v666 = vadd.f32 %v664, %v665
        %v667 = vld [vmem:[#allocation2] sm:$0x1]
        %669 = vset.pattern.permute.xlu0 0
        %670 = vperm.xlu0 %669, %v667
        %v671 = vpop.permute.xlu0 %670
        %v673 = vperm.slane %v671, 0
        %v674 = vadd.f32 %v666, %v673
        %v675 = vxor.u32 %v674, 2147483648
        %v676 = vmul.f32 %v675, 1.442695
        %v677 = vpow.pop %v676
        %v678 = vadd.f32 %v677, 1.0
        %v679 = vrcp.pop %v678
        %v680 = vmul.f32 %v678, %v679
        %v681 = vsub.f32 1.0, %v680
        %v682 = vmul.f32 %v679, %v681
        %v683 = vadd.f32 %v679, %v682
        %vm684 = vweird.f32 %v678
        %vm685 = vweird.f32 %v679
        %vm686 = vmor %vm684, %vm685
        %v687 = vsel %vm686, %v679, %v683
        %v688 = vand.u32 2147483647, %v678
        %vm689 = vcmp.eq.f32.partialorder %v688, 8.507059e+37
        %v690 = vand.u32 %v678, 2147483648
        %v691 = vor.u32 1.1754944e-38, %v690
        %v692 = vsel %vm689, %v691, %v687
        %v693 = vmul.f32 1.0, %v692
        %694 = vst [vmem:[%s273] sm:$0x1] %v693
        %s695 = sand.u32 %s183, 1
        %s696 = scalar_lea.sflag [#allocation4], %s695
        %s697 = sand.u32 %s183, 1
        %s698 = scalar_lea.vmem [#allocation3], %s697
        // Predicated region
        $region49: #{tpu_custom_call.1} parent=47 // pred_check
          %p699 = pneg %p193
        $region50: #{tpu_custom_call.1} parent=47 // pred_check_branch
          %701 = sbr.rel (%p699) target = $region52
        $region51: #{tpu_custom_call.1} parent=47 // pred_region
          %703 = vsyncadd %s696, 0
          %s704 = scalar_lea.hbm %s7, %s23
          %s706 = sshll.u32 %s698, 4
          %s707 = int_to_ptr.vmem [resolvable:$true] %s706
          %s708 = sshll.u32 %s704, 4
          %s709 = int_to_ptr.hbm [resolvable:$true] %s708
          %711 = dma.vmem_to_hbm [thread:$0]  %s707, 16, %s709, %s696
        $region52: #{tpu_custom_call.1} parent=47 // pred_fallthru
          _
      $region48: #{tpu_custom_call.1} parent=5 // pred_fallthru
        _
      %p712 = scmp.le.s32.totalorder 2, %s18
      // Predicated region
      $region53: #{tpu_custom_call.1} parent=5 // pred_check
        %p713 = pneg %p712
      $region54: #{tpu_custom_call.1} parent=5 // pred_check_branch
        %715 = sbr.rel (%p713) target = $region56
      $region55: #{tpu_custom_call.1} parent=5 // pred_region
        %s716 = ssub.s32 %s18, 2
        // Predicated region
        $region57: #{tpu_custom_call.1} parent=55 // pred_check
          %p717 = pneg %p199
        $region58: #{tpu_custom_call.1} parent=55 // pred_check_branch
          %719 = sbr.rel (%p717) target = $region60
        $region59: #{tpu_custom_call.1} parent=55 // pred_region
          %s720 = sand.u32 %s184, 1
          %s721 = scalar_lea.sflag [#allocation4], %s720
          %s722 = sand.u32 %s184, 1
          %s723 = scalar_lea.vmem [#allocation3], %s722
          %725 = dma.done %s721, 16
        $region60: #{tpu_custom_call.1} parent=55 // pred_fallthru
          _
      $region56: #{tpu_custom_call.1} parent=5 // pred_fallthru
        _
    $region6: #{tpu_custom_call.1} parent=1 // loop_footer
      %s22 = sadd.s32 1, %s18
    $region7: #{tpu_custom_call.1} parent=1 // loop_footer_branch
      %17 = sbr.rel target = $region3
    $region8: #{tpu_custom_call.1} parent=1 // loop_exit
      _
    %726 = vsyncpa [#allocation4], 1
    %s727 = scalar_lea.sflag [#allocation4], 1
    %728 = vsyncpa %s727, 1

</llo_original>
